<compile_context>
chip_gen: v7x
topology: tpu7x:2x2x1
jax: 0.10.0
libtpu: 0.0.40
codegen_flags: <defaults>
</compile_context>

<pallas_src>
import functools
import math

import numpy as np
import jax
import jax.numpy as jnp
from jax.experimental import pallas as pl
from jax.experimental.pallas import tpu as pltpu


# ---------------------------------------------------------------------------
# Kernel
# ---------------------------------------------------------------------------
def attention_kernel(hb_ref, enc_ref, wet_ref, v_ref, out_ref, *,
                     compute_dtype, exp_dtype, approx_recip):
    """One T-tile of the attention forward.

    Shapes inside the kernel (native encoder layout, tiled over T only):
      hb_ref : (B, H)    f32  hidden @ W_h^T + bias, T-invariant (resident)
      enc_ref: (tT, B, H)     encoder_outputs tile, native (T,B,H) layout
      wet_ref: (H, H)         W_e^T, pre-transposed (resident)
      v_ref  : (1, H)    f32  v (resident)
      out_ref: (tT, B)   f32  relu(att)^T tile

    NOTE: softmax runs over the *batch* axis (PyTorch legacy implicit dim=0 on
    a 3-D input), so B must stay fully resident in every tile — never tile B.
    """
    # Encoder half of the Linear: rank-3 dot_general contracting the last dim
    # on the MXU with f32 accumulation (no (tT*B, H) reshape -> no relayout).
    enc = enc_ref[...].astype(compute_dtype)
    ze = jax.lax.dot_general(
        enc, wet_ref[...],
        dimension_numbers=(((2,), (0,)), ((), ())),
        preferred_element_type=jnp.float32)                    # (tT, B, H) f32
    z = ze + hb_ref[...][None, :, :]                           # (tT, B, H) f32

    # Softmax over the batch axis (axis=1 in this layout).
    m = jnp.max(z, axis=1, keepdims=True)                      # (tT, 1, H)
    e = jnp.exp((z - m).astype(exp_dtype))                     # EUP; bf16 opt (v7x)
    e32 = e.astype(jnp.float32)                                # sums stay in f32
    s = jnp.sum(e32, axis=1, keepdims=True)                    # (tT, 1, H)

    # Fuse 1/s into the v-weighted reduction: a (tT,1,H) reciprocal instead of
    # a (tT,B,H) divide; the normalized softmax never materializes in VMEM.
    inv_s = pl.reciprocal(s, approx=approx_recip)              # (tT, 1, H)
    w = v_ref[...][None, :, :] * inv_s                         # (tT, 1, H)
    att = jnp.sum(e32 * w, axis=-1)                            # (tT, B)

    out_ref[...] = jnp.maximum(att, 0.0).astype(out_ref.dtype)  # relu


# ---------------------------------------------------------------------------
# Tiling policy
# ---------------------------------------------------------------------------
def _choose_t_tile(T, B, H, compute_elem_bytes, enc_elem_bytes):
    """Pick the T-tile size.

    VMEM accounting per unit of tT (bytes):
      enc input  : 2 buffers x B*H*enc_elem_bytes   (BlockSpec double buffer)
      cast copy  : B*H*compute_elem_bytes
      f32 temps  : ~3 slabs (z, e, e*w)  -> 12 * B*H
      out        : 2 buffers x B*4
    Residents (W_e^T, hb, v) are charged separately.  Targets a ~16 MiB
    per-step working set: far under every generation's VMEM (v7x: 64 MiB
    physical) yet big enough to sit near the HBM roofline.
    """
    resident = H * H * compute_elem_bytes + 2 * B * H * 4 + 2 * H * 4
    budget = max(16 * 1024 * 1024 - resident, 2 * 1024 * 1024)
    per_t = (2 * enc_elem_bytes + compute_elem_bytes + 12) * B * H + 2 * B * 4
    cap = max(8, budget // per_t)

    if T < 256:
        # Small T: a single full-extent tile is exact and cheapest, unless it
        # would blow the VMEM budget (large B*H).
        if T <= cap:
            return T
        return max(8, min((cap // 8) * 8, T))

    # T >= 256: keep >= ~4 grid steps so the enc DMA pipelines behind compute
    # and both v7x TensorCores get tiles; prefer multiples of 128, fall back
    # to multiples of 8; clamp to the VMEM cap.
    tgt = min(pl.cdiv(T, 4), cap)
    if tgt >= 128:
        tT = (tgt // 128) * 128
    else:
        tT = max(8, (tgt // 8) * 8)
    return min(tT, T)


# ---------------------------------------------------------------------------
# pipeline_mode=pl.Buffered(1) support probe (graceful fallback)
# ---------------------------------------------------------------------------
def _copy_kernel(x_ref, o_ref):
    o_ref[...] = x_ref[...]


@functools.lru_cache(maxsize=None)
def _single_buffer_residents_supported():
    """Probe (once, eagerly) whether BlockSpec(pipeline_mode=pl.Buffered(1))
    compiles and runs on this jax/Mosaic build; otherwise fall back to the
    default double-buffered residents."""
    try:
        spec = pl.BlockSpec((8, 128), lambda i: (0, 0),
                            pipeline_mode=pl.Buffered(1))
        fn = pl.pallas_call(
            _copy_kernel,
            out_shape=jax.ShapeDtypeStruct((8, 128), jnp.float32),
            grid=(2,),
            in_specs=[spec],
            out_specs=pl.BlockSpec((8, 128), lambda i: (0, 0)),
        )
        jax.block_until_ready(fn(jnp.zeros((8, 128), jnp.float32)))
        return True
    except Exception:  # conservative fallback: correctness over the VMEM saving
        return False


# ---------------------------------------------------------------------------
# Forward wrapper
# ---------------------------------------------------------------------------
@functools.partial(jax.jit, static_argnames=("compute_dtype", "exp_dtype",
                                             "approx_recip",
                                             "single_buffer_residents"))
def _attention_forward_impl(hidden, encoder_outputs, attn_weight, attn_bias, v,
                            *, compute_dtype, exp_dtype, approx_recip,
                            single_buffer_residents):
    T, B, H = encoder_outputs.shape
    cbytes = np.dtype(compute_dtype).itemsize
    ebytes = np.dtype(encoder_outputs.dtype).itemsize

    # Split the Linear(2H -> H): the hidden half is T-invariant -> hoist it
    # out of the kernel (tiny (B,2H) work); pre-transpose W_e (tiny (H,H)).
    w_h = attn_weight[:, :H]
    w_e_t = jnp.transpose(attn_weight[:, H:]).astype(compute_dtype)      # (H, H)
    hb = (jnp.dot(hidden, w_h.T, preferred_element_type=jnp.float32)
          + attn_bias[None, :]).astype(jnp.float32)                      # (B, H)
    v_2d = v.reshape(1, H).astype(jnp.float32)

    tT = _choose_t_tile(T, B, H, cbytes, ebytes)
    grid = (pl.cdiv(T, tT),)

    resident_kwargs = ({"pipeline_mode": pl.Buffered(1)}
                       if single_buffer_residents else {})

    kernel = functools.partial(attention_kernel,
                               compute_dtype=compute_dtype,
                               exp_dtype=exp_dtype,
                               approx_recip=approx_recip)

    cost = pl.CostEstimate(
        flops=2 * T * B * H * H,
        transcendentals=T * B * H,
        bytes_accessed=(T * B * H * ebytes        # enc (dominant HBM stream)
                        + H * H * cbytes          # W_e^T
                        + B * H * 4 + H * 4       # hb, v
                        + T * B * 4),             # output
    )

    out_tb = pl.pallas_call(
        kernel,
        out_shape=jax.ShapeDtypeStruct((T, B), jnp.float32),
        grid_spec=pltpu.PrefetchScalarGridSpec(
            num_scalar_prefetch=0,
            grid=grid,
            in_specs=[
                pl.BlockSpec((B, H), lambda t: (0, 0), **resident_kwargs),    # hb
                pl.BlockSpec((tT, B, H), lambda t: (t, 0, 0)),                # enc: native layout, tiled over T
                pl.BlockSpec((H, H), lambda t: (0, 0), **resident_kwargs),    # W_e^T
                pl.BlockSpec((1, H), lambda t: (0, 0), **resident_kwargs),    # v
            ],
            out_specs=pl.BlockSpec((tT, B), lambda t: (t, 0)),
        ),
        compiler_params=pltpu.CompilerParams(
            # v7x: both TensorCores split the T tiles (verify in the profile;
            # if one TC idles, switch to CORE_PARALLEL / an explicit core axis).
            dimension_semantics=("parallel",),
            vmem_limit_bytes=64 * 1024 * 1024,
        ),
        cost_estimate=cost,
    )(hb, encoder_outputs, w_e_t, v_2d)

    # Tiny (T, B) -> (B, 1, T): matches relu(att).unsqueeze(1).
    return jnp.transpose(out_tb)[:, None, :]


def attention_forward(hidden, encoder_outputs, attn_weight, attn_bias, v, *,
                      compute_dtype=jnp.bfloat16, exp_dtype=jnp.float32,
                      approx_recip=True):
    """hidden (B,H) f32; encoder_outputs (T,B,H) f32 (native layout, no
    wrapper transpose/cast).  Returns (B,1,T) f32.

    compute_dtype: MXU input dtype for enc / W_e^T.  bf16 is the production
      setting on every generation (v5e's MXU has no fast f32; f32 here is
      validation-only).
    exp_dtype: dtype of the exp input.  bf16 can help a VPU/EUP-bound v7x;
      f32 default keeps v5e safe and maximally accurate.
    """
    single_buf = _single_buffer_residents_supported()     # eager, cached probe
    return _attention_forward_impl(
        hidden, encoder_outputs, attn_weight, attn_bias, v,
        compute_dtype=compute_dtype, exp_dtype=exp_dtype,
        approx_recip=approx_recip, single_buffer_residents=single_buf)


# ---------------------------------------------------------------------------
# Pure-JAX reference (mirrors the PyTorch forward exactly, f32)
# ---------------------------------------------------------------------------
def attention_reference(hidden, encoder_outputs, attn_weight, attn_bias, v):
    T, B, H = encoder_outputs.shape
    h = jnp.broadcast_to(hidden[None, :, :], (T, B, H)).transpose(1, 0, 2)  # (B,T,H)
    enc = encoder_outputs.transpose(1, 0, 2)                                 # (B,T,H)
    cat = jnp.concatenate([h, enc], axis=2)                                  # (B,T,2H)
    z = cat @ attn_weight.T + attn_bias                                      # (B,T,H)
    energy = jax.nn.softmax(z, axis=0)        # PyTorch implicit dim=0 for 3-D input
    att = jnp.einsum("h,bth->bt", v, energy)  # bmm(v, energy^T).squeeze(1)
    return jax.nn.relu(att)[:, None, :]                                      # (B,1,T)


if __name__ == "__main__":
    def make_inputs(key, B, T, H):
        k_hid, k_enc, k_w, k_b, k_v = jax.random.split(key, 5)
        hidden = jax.random.normal(k_hid, (B, H), dtype=jnp.float32)
        enc = jax.random.normal(k_enc, (T, B, H), dtype=jnp.float32)
        bound = 1.0 / math.sqrt(2 * H)                 # nn.Linear(2H, H) init
        w = jax.random.uniform(k_w, (H, 2 * H), jnp.float32, -bound, bound)
        b = jax.random.uniform(k_b, (H,), jnp.float32, -bound, bound)
        stdv = 1.0 / math.sqrt(H)                      # v ~ U(-1/sqrt(H), 1/sqrt(H))
        v = jax.random.uniform(k_v, (H,), jnp.float32, -stdv, stdv)
        return hidden, enc, w, b, v

    key = jax.random.PRNGKey(0)
    k_small, k_big = jax.random.split(key)

    # ---- small shape (module's toy sizes) ---------------------------------
    B, T, H = 2, 8, 32
    hidden, enc, w, b, v = make_inputs(k_small, B, T, H)
    ref = attention_reference(hidden, enc, w, b, v)

    # Exact path: f32 MXU inputs + exact reciprocal -> tight check vs reference.
    out_f32 = jax.block_until_ready(attention_forward(
        hidden, enc, w, b, v, compute_dtype=jnp.float32, approx_recip=False))
    assert out_f32.shape == (B, 1, T), out_f32.shape
    assert jnp.allclose(out_f32, ref, atol=1e-5, rtol=1e-5), "f32 mismatch vs reference"

    # Production path: bf16 MXU inputs (in-kernel cast) + approx EUP reciprocal.
    out_bf16 = jax.block_until_ready(attention_forward(
        hidden, enc, w, b, v, compute_dtype=jnp.bfloat16, approx_recip=True))
    assert out_bf16.shape == (B, 1, T), out_bf16.shape
    assert jnp.allclose(out_bf16, ref, atol=3e-2, rtol=3e-2), "bf16 mismatch vs reference"

    # ---- larger T: exercises the multi-tile grid + partial last tile ------
    B2, T2, H2 = 4, 328, 128
    hidden2, enc2, w2, b2, v2 = make_inputs(k_big, B2, T2, H2)
    ref2 = attention_reference(hidden2, enc2, w2, b2, v2)
    out2 = jax.block_until_ready(attention_forward(
        hidden2, enc2, w2, b2, v2, compute_dtype=jnp.bfloat16, approx_recip=True))
    assert out2.shape == (B2, 1, T2), out2.shape
    assert jnp.allclose(out2, ref2, atol=3e-2, rtol=3e-2), "tiled bf16 mismatch vs reference"

    print("KERNEL_OK")
</pallas_src>

<mosaic_0001>
module attributes {stable_mosaic.version = 11 : i64} {
  func.func @_copy_kernel(%arg0: i32, %arg1: memref<8x128xf32, #tpu.memory_space<vmem>>, %arg2: memref<8x128xf32, #tpu.memory_space<vmem>>) attributes {dimension_semantics = [#tpu.dimension_semantics<arbitrary>], iteration_bounds = array<i64: 2>, scalar_prefetch = 0 : i64, scratch_operands = 0 : i64, tpu.core_type = #tpu.core_type<tc>, window_params = [{pipeline_mode = #tpu.pipeline_mode<synchronous>, transform_indices = @transform_0, window_bounds = array<i64: 8, 128>}, {pipeline_mode = #tpu.pipeline_mode<synchronous>, transform_indices = @transform_1, window_bounds = array<i64: 8, 128>}]} {
    %c0 = arith.constant 0 : index
    %c0_0 = arith.constant 0 : index
    %0 = vector.load %arg1[%c0, %c0_0] : memref<8x128xf32, #tpu.memory_space<vmem>>, vector<8x128xf32>
    %c0_1 = arith.constant 0 : index
    %c0_2 = arith.constant 0 : index
    %1 = vector.load %arg2[%c0_1, %c0_2] : memref<8x128xf32, #tpu.memory_space<vmem>>, vector<8x128xf32>
    tpu.vector_store %arg2[%c0_1, %c0_2], %0 {strides = array<i32>} : memref<8x128xf32, #tpu.memory_space<vmem>>, vector<8x128xf32>,
    return
  }
  func.func @transform_0(%arg0: i32) -> (i32, i32) {
    %c0_i32 = arith.constant 0 : i32
    %c0_i32_0 = arith.constant 0 : i32
    %c0_i32_1 = arith.constant 0 : i32
    return %c0_i32, %c0_i32_0 : i32, i32
  }
  func.func @transform_1(%arg0: i32) -> (i32, i32) {
    %c0_i32 = arith.constant 0 : i32
    %c0_i32_0 = arith.constant 0 : i32
    %c0_i32_1 = arith.constant 0 : i32
    return %c0_i32, %c0_i32_0 : i32, i32
  }
}

module attributes {stable_mosaic.version = 11 : i64} {
  func.func @attention_kernel(%arg0: i32, %arg1: memref<2x32xf32, #tpu.memory_space<vmem>>, %arg2: memref<8x2x32xf32, #tpu.memory_space<vmem>>, %arg3: memref<32x32xf32, #tpu.memory_space<vmem>>, %arg4: memref<1x32xf32, #tpu.memory_space<vmem>>, %arg5: memref<8x2xf32, #tpu.memory_space<vmem>>) attributes {dimension_semantics = [#tpu.dimension_semantics<parallel>], iteration_bounds = array<i64: 1>, scalar_prefetch = 0 : i64, scratch_operands = 0 : i64, tpu.core_type = #tpu.core_type<tc>, window_params = [{pipeline_mode = #tpu.pipeline_mode<synchronous>, transform_indices = @transform_0, window_bounds = array<i64: 2, 32>}, {transform_indices = @transform_1, window_bounds = array<i64: 8, 2, 32>}, {pipeline_mode = #tpu.pipeline_mode<synchronous>, transform_indices = @transform_2, window_bounds = array<i64: 32, 32>}, {pipeline_mode = #tpu.pipeline_mode<synchronous>, transform_indices = @transform_3, window_bounds = array<i64: 1, 32>}, {transform_indices = @transform_4, window_bounds = array<i64: 8, 2>}]} {
    %c0 = arith.constant 0 : index
    %c0_0 = arith.constant 0 : index
    %c0_1 = arith.constant 0 : index
    %0 = vector.load %arg2[%c0, %c0_0, %c0_1] : memref<8x2x32xf32, #tpu.memory_space<vmem>>, vector<8x2x32xf32>
    %c0_2 = arith.constant 0 : index
    %c0_3 = arith.constant 0 : index
    %1 = vector.load %arg3[%c0_2, %c0_3] : memref<32x32xf32, #tpu.memory_space<vmem>>, vector<32x32xf32>
    %cst = arith.constant dense<0.000000e+00> : vector<8x2x32xf32>
    %2 = tpu.matmul %0, %1, %cst {dimension_numbers = #tpu.dot_dimension_numbers<[2], [0], [0, 1], [1], [0, 0, 0, 1, 1, 1], [], []>} : vector<8x2x32xf32>, vector<32x32xf32>, vector<8x2x32xf32> -> vector<8x2x32xf32>
    %c0_4 = arith.constant 0 : index
    %c0_5 = arith.constant 0 : index
    %3 = vector.load %arg1[%c0_4, %c0_5] : memref<2x32xf32, #tpu.memory_space<vmem>>, vector<2x32xf32>
    %4 = vector.shape_cast %3 : vector<2x32xf32> to vector<1x2x32xf32>
    %5 = vector.broadcast %4 : vector<1x2x32xf32> to vector<8x2x32xf32>
    %6 = arith.addf %2, %5 : vector<8x2x32xf32>
    %cst_6 = arith.constant dense<0xFF800000> : vector<8x32xf32>
    %7 = vector.multi_reduction <maximumf>, %6, %cst_6 [1] : vector<8x2x32xf32> to vector<8x32xf32>
    %8 = vector.shape_cast %7 : vector<8x32xf32> to vector<8x1x32xf32>
    %9 = vector.broadcast %8 : vector<8x1x32xf32> to vector<8x2x32xf32>
    %10 = arith.subf %6, %9 : vector<8x2x32xf32>
    %11 = math.exp %10 : vector<8x2x32xf32>
    %cst_7 = arith.constant dense<0.000000e+00> : vector<8x32xf32>
    %12 = vector.multi_reduction <add>, %11, %cst_7 [1] : vector<8x2x32xf32> to vector<8x32xf32>
    %13 = vector.shape_cast %12 : vector<8x32xf32> to vector<8x1x32xf32>
    %14 = tpu.reciprocal %13 : vector<8x1x32xf32> -> vector<8x1x32xf32>
    %c0_8 = arith.constant 0 : index
    %c0_9 = arith.constant 0 : index
    %15 = vector.load %arg4[%c0_8, %c0_9] : memref<1x32xf32, #tpu.memory_space<vmem>>, vector<1x32xf32>
    %16 = vector.shape_cast %15 : vector<1x32xf32> to vector<1x1x32xf32>
    %17 = vector.broadcast %16 : vector<1x1x32xf32> to vector<8x1x32xf32>
    %18 = arith.mulf %17, %14 : vector<8x1x32xf32>
    %19 = vector.broadcast %18 : vector<8x1x32xf32> to vector<8x2x32xf32>
    %20 = arith.mulf %11, %19 : vector<8x2x32xf32>
    %cst_10 = arith.constant dense<0.000000e+00> : vector<8x2xf32>
    %21 = vector.multi_reduction <add>, %20, %cst_10 [2] : vector<8x2x32xf32> to vector<8x2xf32>
    %cst_11 = arith.constant 0.000000e+00 : f32
    %22 = vector.broadcast %cst_11 : f32 to vector<8x2xf32>
    %23 = arith.maximumf %21, %22 : vector<8x2xf32>
    %c0_12 = arith.constant 0 : index
    %c0_13 = arith.constant 0 : index
    %24 = vector.load %arg5[%c0_12, %c0_13] : memref<8x2xf32, #tpu.memory_space<vmem>>, vector<8x2xf32>
    tpu.vector_store %arg5[%c0_12, %c0_13], %23 {strides = array<i32>} : memref<8x2xf32, #tpu.memory_space<vmem>>, vector<8x2xf32>,
    return
  }
  func.func @transform_0(%arg0: i32) -> (i32, i32) {
    %c0_i32 = arith.constant 0 : i32
    %c0_i32_0 = arith.constant 0 : i32
    %c0_i32_1 = arith.constant 0 : i32
    return %c0_i32, %c0_i32_0 : i32, i32
  }
  func.func @transform_1(%arg0: i32) -> (i32, i32, i32) {
    %c0_i32 = arith.constant 0 : i32
    %c0_i32_0 = arith.constant 0 : i32
    %c0_i32_1 = arith.constant 0 : i32
    return %arg0, %c0_i32, %c0_i32_0 : i32, i32, i32
  }
  func.func @transform_2(%arg0: i32) -> (i32, i32) {
    %c0_i32 = arith.constant 0 : i32
    %c0_i32_0 = arith.constant 0 : i32
    %c0_i32_1 = arith.constant 0 : i32
    return %c0_i32, %c0_i32_0 : i32, i32
  }
  func.func @transform_3(%arg0: i32) -> (i32, i32) {
    %c0_i32 = arith.constant 0 : i32
    %c0_i32_0 = arith.constant 0 : i32
    %c0_i32_1 = arith.constant 0 : i32
    return %c0_i32, %c0_i32_0 : i32, i32
  }
  func.func @transform_4(%arg0: i32) -> (i32, i32) {
    %c0_i32 = arith.constant 0 : i32
    %c0_i32_0 = arith.constant 0 : i32
    return %arg0, %c0_i32 : i32, i32
  }
}

</mosaic_0001>

<llo_original>
// kernel: tpu_custom_call.1
$region0: #{tpu_custom_call.1}
  #allocation0 [shape = 'u32[]', space=smem, size = 0x4, offset = 0x4, fixed_abs, tag = 'smem constant byte address 0x4 - core index']
  #allocation1 [shape = 'u32[144,128]{1,0:T(1,128)}', space=vmem, size = 0x12000, scoped, tag = 'internal scratch']
  %s0 = inlined_call_operand.hbm [shape: f32[8,128], index: 0, kind: input, shape index: {}]
  %s1 = inlined_call_operand.hbm [shape: f32[8,128], index: 1, kind: output, shape index: {}]
  %s2 = sld [smem:[#allocation0]]
  $region41: #{tpu_custom_call.1} parent=0
    _
  %s4 = ssub.s32 1, %s2
  %s5 = scalar_select 0, %s4, %s2
  $region1: #{tpu_custom_call.1} parent=0
    #allocation2 [shape = 'u8[4096]{0}', space=vmem, size = 0x1000, scoped, tag = 'input window, operand 0, single buffered']
    #allocation3 [shape = 's32[2]{0}', space=sflag, size = 0x8, scoped, tag = 'scoped memory for tpu_custom_call.1']
    #allocation4 [shape = 's32[2]{0}', space=sflag, size = 0x8, scoped, tag = 'scoped memory for tpu_custom_call.1']
    #allocation5 [shape = 'u8[4096]{0}', space=vmem, size = 0x1000, scoped, tag = 'output window, operand 0, single buffered']
    %6 = vsyncpa [#allocation3], 0
    %7 = vsyncpa [#allocation4], 0
    loop: start=0, step=1, limit=4
    $region2: #{tpu_custom_call.1} parent=1 // loop_pre_header
      _
    $region3: #{tpu_custom_call.1} parent=1 // loop_header
      %s9 = sphi 0, %s13
      %p10 = scmp.ge.s32.totalorder %s9, 4
      %s17 = sphi 0, %s17
      %s19 = sphi 0, %s17
      %s20 = sphi 0, %s19
      %s34 = sphi 0, %s20
      %s38 = sphi 0, %s38
      %s40 = sphi 0, %s38
      %s41 = sphi 0, %s40
      %s55 = sphi 0, %s41
    $region4: #{tpu_custom_call.1} parent=1 // loop_header_branch
      %12 = sbr.rel (%p10) target = $region8
    $region5: #{tpu_custom_call.1} parent=1 // loop_body
      %s14 = ssub.s32 %s9, 1
      %s15 = ssub.s32 %s9, 2
      %s16 = sadd.s32 %s9, 1
      %s18 = sadd.s32 %s17, 1
      %p21 = scmp.eq.s32.totalorder %s9, 1
      %p22 = scmp.ne.s32.totalorder %s17, %s19
      %p23 = scmp.eq.s32.totalorder %s9, 0
      %p24 = por %p22, %p23
      %p25 = scmp.ne.s32.totalorder %s17, %s19
      %p26 = scmp.eq.s32.totalorder %s14, 1
      %p27 = por %p25, %p26
      %p28 = scmp.ne.s32.totalorder %s19, %s20
      %p29 = scmp.eq.s32.totalorder %s14, 0
      %p30 = por %p28, %p29
      %p31 = scmp.ne.s32.totalorder %s19, %s20
      %p32 = scmp.eq.s32.totalorder %s15, 1
      %p33 = por %p31, %p32
      %p35 = scmp.ne.s32.totalorder %s20, %s34
      %p36 = scmp.eq.s32.totalorder %s15, 0
      %p37 = por %p35, %p36
      %s39 = sadd.s32 %s38, 1
      %p42 = scmp.eq.s32.totalorder %s9, 1
      %p43 = scmp.ne.s32.totalorder %s38, %s40
      %p44 = scmp.eq.s32.totalorder %s9, 0
      %p45 = por %p43, %p44
      %p46 = scmp.ne.s32.totalorder %s38, %s40
      %p47 = scmp.eq.s32.totalorder %s14, 1
      %p48 = por %p46, %p47
      %p49 = scmp.ne.s32.totalorder %s40, %s41
      %p50 = scmp.eq.s32.totalorder %s14, 0
      %p51 = por %p49, %p50
      %p52 = scmp.ne.s32.totalorder %s40, %s41
      %p53 = scmp.eq.s32.totalorder %s15, 1
      %p54 = por %p52, %p53
      %p56 = scmp.ne.s32.totalorder %s41, %s55
      %p57 = scmp.eq.s32.totalorder %s15, 0
      %p58 = por %p56, %p57
      %p59 = scmp.le.s32.totalorder 1, %s9
      %p60 = scmp.lt.s32.totalorder %s9, 3
      %p61 = pnand %p59, %p60
      %p62 = pneg %p61
      // Predicated region
      $region9: #{tpu_custom_call.1} parent=5 // pred_check
        _
      $region10: #{tpu_custom_call.1} parent=5 // pred_check_branch
        %64 = sbr.rel (%p61) target = $region12
      $region11: #{tpu_custom_call.1} parent=5 // pred_region
        %s65 = ssub.s32 %s9, 1
        // Predicated region
        $region13: #{tpu_custom_call.1} parent=11 // pred_check
          %p66 = pneg %p30
        $region14: #{tpu_custom_call.1} parent=11 // pred_check_branch
          %68 = sbr.rel (%p66) target = $region16
        $region15: #{tpu_custom_call.1} parent=11 // pred_region
          %s70 = ssub.s32 128, 128
          %71 = vsyncadd [#allocation3], %s70
          %s73 = sshll.u32 [#allocation2], 4
          %s74 = int_to_ptr.vmem [resolvable:$true] %s73
          %76 = dma.hbm_to_vmem [thread:$0]  %s0, 128, %s74, [#allocation3]
        $region16: #{tpu_custom_call.1} parent=11 // pred_fallthru
          _
      $region12: #{tpu_custom_call.1} parent=5 // pred_fallthru
        _
      %p77 = scmp.lt.s32.totalorder %s9, 2
      // Predicated region
      $region17: #{tpu_custom_call.1} parent=5 // pred_check
        %p78 = pneg %p77
      $region18: #{tpu_custom_call.1} parent=5 // pred_check_branch
        %80 = sbr.rel (%p78) target = $region20
      $region19: #{tpu_custom_call.1} parent=5 // pred_region
        _
      $region20: #{tpu_custom_call.1} parent=5 // pred_fallthru
        _
      %p81 = scmp.le.s32.totalorder 1, %s9
      %p82 = scmp.lt.s32.totalorder %s9, 3
      %p83 = pnand %p81, %p82
      %p84 = pneg %p83
      // Predicated region
      $region21: #{tpu_custom_call.1} parent=5 // pred_check
        _
      $region22: #{tpu_custom_call.1} parent=5 // pred_check_branch
        %86 = sbr.rel (%p83) target = $region24
      $region23: #{tpu_custom_call.1} parent=5 // pred_region
        %s87 = ssub.s32 %s9, 1
        // Predicated region
        $region25: #{tpu_custom_call.1} parent=23 // pred_check
          %p88 = pneg %p30
        $region26: #{tpu_custom_call.1} parent=23 // pred_check_branch
          %90 = sbr.rel (%p88) target = $region28
        $region27: #{tpu_custom_call.1} parent=23 // pred_region
          %91 = dma.done [#allocation3], 128
        $region28: #{tpu_custom_call.1} parent=23 // pred_fallthru
          _
        %p92 = pneg %p30
        %p93 = pneg %p27
        %p94 = pneg %p51
        %p95 = pneg %p48
        %v96 = vld [vmem:[#allocation2] sm:$0xff]
        %97 = vst [vmem:[#allocation5] sm:$0xff] %v96
        // Predicated region
        $region29: #{tpu_custom_call.1} parent=23 // pred_check
          %p98 = pneg %p48
        $region30: #{tpu_custom_call.1} parent=23 // pred_check_branch
          %100 = sbr.rel (%p98) target = $region32
        $region31: #{tpu_custom_call.1} parent=23 // pred_region
          %s102 = ssub.s32 128, 128
          %103 = vsyncadd [#allocation4], %s102
          %s105 = sshll.u32 [#allocation5], 4
          %s106 = int_to_ptr.vmem [resolvable:$true] %s105
          %108 = dma.vmem_to_hbm [thread:$0]  %s106, 128, %s1, [#allocation4]
        $region32: #{tpu_custom_call.1} parent=23 // pred_fallthru
          _
        // Predicated region
        $region33: #{tpu_custom_call.1} parent=23 // pred_check
          %p109 = pneg %p48
        $region34: #{tpu_custom_call.1} parent=23 // pred_check_branch
          %111 = sbr.rel (%p109) target = $region36
        $region35: #{tpu_custom_call.1} parent=23 // pred_region
          %112 = dma.done [#allocation4], 128
        $region36: #{tpu_custom_call.1} parent=23 // pred_fallthru
          _
      $region24: #{tpu_custom_call.1} parent=5 // pred_fallthru
        _
      %p113 = scmp.le.s32.totalorder 2, %s9
      // Predicated region
      $region37: #{tpu_custom_call.1} parent=5 // pred_check
        %p114 = pneg %p113
      $region38: #{tpu_custom_call.1} parent=5 // pred_check_branch
        %116 = sbr.rel (%p114) target = $region40
      $region39: #{tpu_custom_call.1} parent=5 // pred_region
        %s117 = ssub.s32 %s9, 2
      $region40: #{tpu_custom_call.1} parent=5 // pred_fallthru
        _
    $region6: #{tpu_custom_call.1} parent=1 // loop_footer
      %s13 = sadd.s32 1, %s9
    $region7: #{tpu_custom_call.1} parent=1 // loop_footer_branch
      %8 = sbr.rel target = $region3
    $region8: #{tpu_custom_call.1} parent=1 // loop_exit
      _
    %118 = vsyncpa [#allocation3], 1
    %s119 = scalar_lea.sflag [#allocation3], 1
    %120 = vsyncpa %s119, 1
    %121 = vsyncpa [#allocation4], 1
    %s122 = scalar_lea.sflag [#allocation4], 1
    %123 = vsyncpa %s122, 1

// kernel: _attention_forward_impl.1
$region0: #{_attention_forward_impl.1}
  #allocation0 [shape = 'u32[]', space=smem, size = 0x4, offset = 0x4, fixed_abs, tag = 'smem constant byte address 0x4 - core index']
  #allocation1 [shape = 'u32[144,128]{1,0:T(1,128)}', space=vmem, size = 0x12000, scoped, tag = 'internal scratch']
  %s0 = inlined_call_operand.hbm [shape: f32[2,32], index: 0, kind: input, shape index: {}]
  %s1 = inlined_call_operand.hbm [shape: f32[8,2,32], index: 1, kind: input, shape index: {}]
  %s2 = inlined_call_operand.hbm [shape: f32[32,32], index: 2, kind: input, shape index: {}]
  %s3 = inlined_call_operand.hbm [shape: f32[1,32], index: 3, kind: input, shape index: {}]
  %s4 = inlined_call_operand.hbm [shape: f32[8,2], index: 4, kind: output, shape index: {}]
  %s5 = sld [smem:[#allocation0]]
  $region42: #{_attention_forward_impl.1} parent=0
    _
  %s7 = ssub.s32 1, %s5
  %s8 = scalar_select 0, %s7, %s5
  $region1: #{_attention_forward_impl.1} parent=0
    #allocation2 [shape = 'u8[1024]{0}', space=vmem, size = 0x400, scoped, tag = 'input window, operand 0, single buffered']
    #allocation3 [shape = 's32[1]{0}', space=sflag, size = 0x4, scoped, tag = 'scoped memory for _attention_forward_impl.1']
    #allocation4 [shape = 's32[1]{0}', space=sflag, size = 0x4, scoped, tag = 'scoped memory for _attention_forward_impl.1']
    #allocation5 [shape = 'u8[8192]{0}', space=vmem, size = 0x2000, scoped, tag = 'input window, operand 1, single buffered']
    #allocation6 [shape = 's32[1]{0}', space=sflag, size = 0x4, scoped, tag = 'scoped memory for _attention_forward_impl.1']
    #allocation7 [shape = 'u8[16384]{0}', space=vmem, size = 0x4000, scoped, tag = 'input window, operand 2, single buffered']
    #allocation8 [shape = 'u8[512]{0}', space=vmem, size = 0x400, scoped, tag = 'input window, operand 3, single buffered']
    #allocation9 [shape = 's32[1]{0}', space=sflag, size = 0x4, scoped, tag = 'scoped memory for _attention_forward_impl.1']
    #allocation10 [shape = 'u8[4096]{0}', space=vmem, size = 0x1000, scoped, tag = 'output window, operand 0, single buffered']
    %9 = vsyncpa [#allocation3], 0
    %10 = vsyncpa [#allocation6], 0
    %11 = vsyncpa [#allocation9], 0
    %12 = vsyncpa [#allocation4], 0
    // Predicated region
    $region2: #{_attention_forward_impl.1} parent=1 // pred_check
      _
    $region3: #{_attention_forward_impl.1} parent=1 // pred_check_branch
      %14 = sbr.rel (0) target = $region5
    $region4: #{_attention_forward_impl.1} parent=1 // pred_region
      %s16 = ssub.s32 32, 32
      %17 = vsyncadd [#allocation3], %s16
      %s19 = sshll.u32 [#allocation2], 4
      %s20 = int_to_ptr.vmem [resolvable:$true] %s19
      %22 = dma.hbm_to_vmem [thread:$0]  %s0, 32, %s20, [#allocation3]
    $region5: #{_attention_forward_impl.1} parent=1 // pred_fallthru
      _
    // Predicated region
    $region6: #{_attention_forward_impl.1} parent=1 // pred_check
      _
    $region7: #{_attention_forward_impl.1} parent=1 // pred_check_branch
      %24 = sbr.rel (0) target = $region9
    $region8: #{_attention_forward_impl.1} parent=1 // pred_region
      %s26 = ssub.s32 256, 256
      %27 = vsyncadd [#allocation6], %s26
      %s28 = sshll.u32 [#allocation5], 4
      %s29 = int_to_ptr.vmem [resolvable:$true] %s28
      %34 = dma.hbm_to_vmem [thread:$0]  %s1, 256, %s29, [#allocation6], 32, 32, 2
    $region9: #{_attention_forward_impl.1} parent=1 // pred_fallthru
      _
    // Predicated region
    $region10: #{_attention_forward_impl.1} parent=1 // pred_check
      _
    $region11: #{_attention_forward_impl.1} parent=1 // pred_check_branch
      %36 = sbr.rel (0) target = $region13
    $region12: #{_attention_forward_impl.1} parent=1 // pred_region
      %s38 = ssub.s32 512, 512
      %39 = vsyncadd [#allocation6], %s38
      %s40 = sshll.u32 [#allocation7], 4
      %s41 = int_to_ptr.vmem [resolvable:$true] %s40
      %46 = dma.hbm_to_vmem [thread:$0]  %s2, 512, %s41, [#allocation6], 128, 128, 8
    $region13: #{_attention_forward_impl.1} parent=1 // pred_fallthru
      _
    // Predicated region
    $region14: #{_attention_forward_impl.1} parent=1 // pred_check
      _
    $region15: #{_attention_forward_impl.1} parent=1 // pred_check_branch
      %48 = sbr.rel (0) target = $region17
    $region16: #{_attention_forward_impl.1} parent=1 // pred_region
      %s50 = ssub.s32 16, 16
      %51 = vsyncadd [#allocation9], %s50
      %s53 = sshll.u32 [#allocation8], 4
      %s54 = int_to_ptr.vmem [resolvable:$true] %s53
      %56 = dma.hbm_to_vmem [thread:$0]  %s3, 16, %s54, [#allocation9]
    $region17: #{_attention_forward_impl.1} parent=1 // pred_fallthru
      _
    // Predicated region
    $region18: #{_attention_forward_impl.1} parent=1 // pred_check
      _
    $region19: #{_attention_forward_impl.1} parent=1 // pred_check_branch
      %58 = sbr.rel (0) target = $region21
    $region20: #{_attention_forward_impl.1} parent=1 // pred_region
      %59 = dma.done [#allocation3], 32
    $region21: #{_attention_forward_impl.1} parent=1 // pred_fallthru
      _
    // Predicated region
    $region22: #{_attention_forward_impl.1} parent=1 // pred_check
      _
    $region23: #{_attention_forward_impl.1} parent=1 // pred_check_branch
      %61 = sbr.rel (0) target = $region25
    $region24: #{_attention_forward_impl.1} parent=1 // pred_region
      %62 = dma.done [#allocation6], 256
    $region25: #{_attention_forward_impl.1} parent=1 // pred_fallthru
      _
    // Predicated region
    $region26: #{_attention_forward_impl.1} parent=1 // pred_check
      _
    $region27: #{_attention_forward_impl.1} parent=1 // pred_check_branch
      %64 = sbr.rel (0) target = $region29
    $region28: #{_attention_forward_impl.1} parent=1 // pred_region
      %65 = dma.done [#allocation6], 512
    $region29: #{_attention_forward_impl.1} parent=1 // pred_fallthru
      _
    // Predicated region
    $region30: #{_attention_forward_impl.1} parent=1 // pred_check
      _
    $region31: #{_attention_forward_impl.1} parent=1 // pred_check_branch
      %67 = sbr.rel (0) target = $region33
    $region32: #{_attention_forward_impl.1} parent=1 // pred_region
      %68 = dma.done [#allocation9], 16
    $region33: #{_attention_forward_impl.1} parent=1 // pred_fallthru
      _
    %v69 = vld [vmem:[#allocation5] sm:$0x3]
    %v70 = vld [vmem:[#allocation5 + $0x2] sm:$0x3]
    %v71 = vld [vmem:[#allocation5 + $0x4] sm:$0x3]
    %v72 = vld [vmem:[#allocation5 + $0x6] sm:$0x3]
    %v73 = vld [vmem:[#allocation5 + $0x8] sm:$0x3]
    %v74 = vld [vmem:[#allocation5 + $0xa] sm:$0x3]
    %v75 = vld [vmem:[#allocation5 + $0xc] sm:$0x3]
    %v76 = vld [vmem:[#allocation5 + $0xe] sm:$0x3]
    %v77 = vld [vmem:[#allocation7] sm:$0xff]
    %v78 = vld [vmem:[#allocation7 + $0x8] sm:$0xff]
    %v79 = vld [vmem:[#allocation7 + $0x10] sm:$0xff]
    %v80 = vld [vmem:[#allocation7 + $0x18] sm:$0xff]
    %v81 = vld [vmem:[#allocation2] sm:$0x3]
    %v90 = vcombine.low %v69, %v70
    %v91 = vcombine.low %v71, %v72
    %v93 = vunpack.c.l.s4 1983009808
    %v94 = vunpack.c.0.s8 %v93
    %v95 = vlaneseq
    %v96 = vshrl.u32 %v95, 7
    %v97 = vsub.s32 %v94, %v96
    %v98 = vrot.slane %v90, %v97
    %v100 = vunpack.c.l.s4 1983009808
    %v101 = vunpack.c.0.s8 %v100
    %v102 = vlaneseq
    %v103 = vshrl.u32 %v102, 7
    %v104 = vsub.s32 %v101, %v103
    %v105 = vrot.slane %v91, %v104
    %v106 = vcombine.low %v98, %v105
    %v107 = vcombine.low %v73, %v74
    %v108 = vcombine.low %v75, %v76
    %v110 = vunpack.c.l.s4 1983009808
    %v111 = vunpack.c.0.s8 %v110
    %v112 = vlaneseq
    %v113 = vshrl.u32 %v112, 7
    %v114 = vsub.s32 %v111, %v113
    %v115 = vrot.slane %v107, %v114
    %v117 = vunpack.c.l.s4 1983009808
    %v118 = vunpack.c.0.s8 %v117
    %v119 = vlaneseq
    %v120 = vshrl.u32 %v119, 7
    %v121 = vsub.s32 %v118, %v120
    %v122 = vrot.slane %v108, %v121
    %v123 = vcombine.low %v115, %v122
    %v125 = vcombine.low %v81, %v81
    %v127 = vunpack.c.l.s4 1983009808
    %v128 = vunpack.c.0.s8 %v127
    %v129 = vlaneseq
    %v130 = vshrl.u32 %v129, 7
    %v131 = vsub.s32 %v128, %v130
    %v132 = vrot.slane %v125, %v131
    %v133 = vcombine.low %v132, %v132
    %vm135 = vcmask 261120
    %v136 = vsel %vm135, %v106, 0
    %v138 = vsel %vm135, %v123, 0
    %140 = vmatprep.subr.mxu0 0.0
    %141 = vmatpush1.msra.mxu0 %v77
    %142 = vmatprep.subr.mxu0 0.0
    %143 = vmatpush1.msra.mxu0 %v78
    %144 = vmatprep.subr.mxu0 0.0
    %145 = vmatpush1.msra.mxu0 %v79
    %146 = vmatprep.subr.mxu0 0.0
    %147 = vmatpush1.msra.mxu0 %v80
    %148 = vmatprep.subr.mxu0 0.0
    %149 = vmatpush1.msra.mxu0 0.0
    %150 = vmatprep.subr.mxu0 0.0
    %151 = vmatpush1.msra.mxu0 0.0
    %152 = vmatprep.subr.mxu0 0.0
    %153 = vmatpush1.msra.mxu0 0.0
    %154 = vmatprep.subr.mxu0 0.0
    %155 = vmatpush1.msra.mxu0 0.0
    %156 = vmatprep.subr.mxu0 0.0
    %157 = vmatpush1.msra.mxu0 0.0
    %158 = vmatprep.subr.mxu0 0.0
    %159 = vmatpush1.msra.mxu0 0.0
    %160 = vmatprep.subr.mxu0 0.0
    %161 = vmatpush1.msra.mxu0 0.0
    %162 = vmatprep.subr.mxu0 0.0
    %163 = vmatpush1.msra.mxu0 0.0
    %164 = vmatprep.subr.mxu0 0.0
    %165 = vmatpush1.msra.mxu0 0.0
    %166 = vmatprep.subr.mxu0 0.0
    %167 = vmatpush1.msra.mxu0 0.0
    %168 = vmatprep.subr.mxu0 0.0
    %169 = vmatpush1.msra.mxu0 0.0
    %170 = vmatprep.subr.mxu0 0.0
    %171 = vmatpush1.msra.mxu0 0.0
    %172 = vmatprep.subr.mxu0 0.0
    %173 = vmatpush1.msra.mxu0 0.0
    %174 = vmatprep.subr.mxu0 0.0
    %175 = vmatpush1.msra.mxu0 0.0
    %176 = vmatprep.subr.mxu0 0.0
    %177 = vmatpush1.msra.mxu0 0.0
    %178 = vmatprep.subr.mxu0 0.0
    %179 = vmatpush1.msra.mxu0 0.0
    %180 = vmatprep.subr.mxu0 0.0
    %181 = vmatpush1.msra.mxu0 0.0
    %182 = vmatprep.subr.mxu0 0.0
    %183 = vmatpush1.msra.mxu0 0.0
    %184 = vmatprep.subr.mxu0 0.0
    %185 = vmatpush1.msra.mxu0 0.0
    %186 = vmatprep.subr.mxu0 0.0
    %187 = vmatpush1.msra.mxu0 0.0
    %188 = vmatprep.subr.mxu0 0.0
    %189 = vmatpush1.msra.mxu0 0.0
    %190 = vmatprep.subr.mxu0 0.0
    %191 = vmatpush1.msra.mxu0 0.0
    %192 = vmatprep.subr.mxu0 0.0
    %193 = vmatpush1.msra.mxu0 0.0
    %194 = vmatprep.subr.mxu0 0.0
    %195 = vmatpush1.msra.mxu0 0.0
    %196 = vmatprep.subr.mxu0 0.0
    %197 = vmatpush1.msra.mxu0 0.0
    %198 = vmatprep.subr.mxu0 0.0
    %199 = vmatpush1.msra.mxu0 0.0
    %200 = vmatprep.subr.mxu0 0.0
    %201 = vmatpush1.msra.mxu0 0.0
    %202 = vmatprep.subr.mxu0 0.0
    %203 = vmatpush1.msra.mxu0 0.0
    %204 = vmatprep.mubr.f32.mxu0 0.0
    %205 = vmatmul.mubr.f32.gmra.mrb[0].mxu0 %v136
    %v206 = vpop.f32.mrb[0].mxu0
    %v207 = vadd.f32 %v133, %v206
    %v208 = vpop.f32.mrb[0].mxu0
    %209 = vmatprep.mubr.f32.mxu0 0.0
    %210 = vmatmul.mubr.f32.gmra.mrb[0].mxu0 %v138
    %v211 = vpop.f32.mrb[0].mxu0
    %v212 = vadd.f32 %v133, %v211
    %v213 = vpop.f32.mrb[0].mxu0
    %214 = vdwg.mxu0
    %v217 = vcombine.high %v207, %v207
    %v219 = vunpack.c.l.s4 1983009808
    %v220 = vunpack.c.0.s8 %v219
    %v221 = vlaneseq
    %v222 = vshrl.u32 %v221, 7
    %v223 = vsub.s32 %v220, %v222
    %v224 = vrot.slane %v207, %v223
    %v226 = vunpack.c.l.s4 1983009808
    %v227 = vunpack.c.0.s8 %v226
    %v228 = vlaneseq
    %v229 = vshrl.u32 %v228, 7
    %v230 = vsub.s32 %v227, %v229
    %v231 = vrot.slane %v217, %v230
    %v232 = vcombine.high %v224, %v224
    %v233 = vcombine.high %v231, %v231
    %v234 = vcombine.high %v212, %v212
    %v236 = vunpack.c.l.s4 1983009808
    %v237 = vunpack.c.0.s8 %v236
    %v238 = vlaneseq
    %v239 = vshrl.u32 %v238, 7
    %v240 = vsub.s32 %v237, %v239
    %v241 = vrot.slane %v212, %v240
    %v243 = vunpack.c.l.s4 1983009808
    %v244 = vunpack.c.0.s8 %v243
    %v245 = vlaneseq
    %v246 = vshrl.u32 %v245, 7
    %v247 = vsub.s32 %v244, %v246
    %v248 = vrot.slane %v234, %v247
    %v249 = vcombine.high %v241, %v241
    %v250 = vcombine.high %v248, %v248
    %vm259 = vcmask 254976
    %v260 = vsel %vm259, %v224, -inf
    %v261 = vrot.slane %v260, 4
    %v262 = vmax.f32 %v260, %v261
    %v263 = vrot.slane %v262, 2
    %v264 = vmax.f32 %v262, %v263
    %v265 = vrot.slane %v264, 1
    %v266 = vmax.f32 %v264, %v265
    %v267 = vsel %vm259, %v232, -inf
    %v268 = vrot.slane %v267, 4
    %v269 = vmax.f32 %v267, %v268
    %v270 = vrot.slane %v269, 2
    %v271 = vmax.f32 %v269, %v270
    %v272 = vrot.slane %v271, 1
    %v273 = vmax.f32 %v271, %v272
    %v274 = vsel %vm259, %v231, -inf
    %v275 = vrot.slane %v274, 4
    %v276 = vmax.f32 %v274, %v275
    %v277 = vrot.slane %v276, 2
    %v278 = vmax.f32 %v276, %v277
    %v279 = vrot.slane %v278, 1
    %v280 = vmax.f32 %v278, %v279
    %v281 = vsel %vm259, %v233, -inf
    %v282 = vrot.slane %v281, 4
    %v283 = vmax.f32 %v281, %v282
    %v284 = vrot.slane %v283, 2
    %v285 = vmax.f32 %v283, %v284
    %v286 = vrot.slane %v285, 1
    %v287 = vmax.f32 %v285, %v286
    %v288 = vsel %vm259, %v241, -inf
    %v289 = vrot.slane %v288, 4
    %v290 = vmax.f32 %v288, %v289
    %v291 = vrot.slane %v290, 2
    %v292 = vmax.f32 %v290, %v291
    %v293 = vrot.slane %v292, 1
    %v294 = vmax.f32 %v292, %v293
    %v295 = vsel %vm259, %v249, -inf
    %v296 = vrot.slane %v295, 4
    %v297 = vmax.f32 %v295, %v296
    %v298 = vrot.slane %v297, 2
    %v299 = vmax.f32 %v297, %v298
    %v300 = vrot.slane %v299, 1
    %v301 = vmax.f32 %v299, %v300
    %v302 = vsel %vm259, %v248, -inf
    %v303 = vrot.slane %v302, 4
    %v304 = vmax.f32 %v302, %v303
    %v305 = vrot.slane %v304, 2
    %v306 = vmax.f32 %v304, %v305
    %v307 = vrot.slane %v306, 1
    %v308 = vmax.f32 %v306, %v307
    %v309 = vsel %vm259, %v250, -inf
    %v310 = vrot.slane %v309, 4
    %v311 = vmax.f32 %v309, %v310
    %v312 = vrot.slane %v311, 2
    %v313 = vmax.f32 %v311, %v312
    %v314 = vrot.slane %v313, 1
    %v315 = vmax.f32 %v313, %v314
    %v316 = vsub.f32 %v224, %v266
    %v317 = vsub.f32 %v232, %v273
    %v318 = vsub.f32 %v231, %v280
    %v319 = vsub.f32 %v233, %v287
    %v320 = vsub.f32 %v241, %v294
    %v321 = vsub.f32 %v249, %v301
    %v322 = vsub.f32 %v248, %v308
    %v323 = vsub.f32 %v250, %v315
    %v324 = vmul.f32 %v316, 1.442695
    %v325 = vpow.pop %v324
    %v326 = vmul.f32 %v317, 1.442695
    %v327 = vpow.pop %v326
    %v328 = vmul.f32 %v318, 1.442695
    %v329 = vpow.pop %v328
    %v330 = vmul.f32 %v319, 1.442695
    %v331 = vpow.pop %v330
    %v332 = vmul.f32 %v320, 1.442695
    %v333 = vpow.pop %v332
    %v334 = vmul.f32 %v321, 1.442695
    %v335 = vpow.pop %v334
    %v336 = vmul.f32 %v322, 1.442695
    %v337 = vpow.pop %v336
    %v338 = vmul.f32 %v323, 1.442695
    %v339 = vpow.pop %v338
    %v340 = vsel %vm259, %v325, 0.0
    %v341 = vrot.slane %v340, 4
    %v342 = vadd.f32 %v340, %v341
    %v343 = vrot.slane %v342, 2
    %v344 = vadd.f32 %v342, %v343
    %v345 = vrot.slane %v344, 1
    %v346 = vadd.f32 %v344, %v345
    %v347 = vsel %vm259, %v327, 0.0
    %v348 = vrot.slane %v347, 4
    %v349 = vadd.f32 %v347, %v348
    %v350 = vrot.slane %v349, 2
    %v351 = vadd.f32 %v349, %v350
    %v352 = vrot.slane %v351, 1
    %v353 = vadd.f32 %v351, %v352
    %v354 = vsel %vm259, %v329, 0.0
    %v355 = vrot.slane %v354, 4
    %v356 = vadd.f32 %v354, %v355
    %v357 = vrot.slane %v356, 2
    %v358 = vadd.f32 %v356, %v357
    %v359 = vrot.slane %v358, 1
    %v360 = vadd.f32 %v358, %v359
    %v361 = vsel %vm259, %v331, 0.0
    %v362 = vrot.slane %v361, 4
    %v363 = vadd.f32 %v361, %v362
    %v364 = vrot.slane %v363, 2
    %v365 = vadd.f32 %v363, %v364
    %v366 = vrot.slane %v365, 1
    %v367 = vadd.f32 %v365, %v366
    %v368 = vsel %vm259, %v333, 0.0
    %v369 = vrot.slane %v368, 4
    %v370 = vadd.f32 %v368, %v369
    %v371 = vrot.slane %v370, 2
    %v372 = vadd.f32 %v370, %v371
    %v373 = vrot.slane %v372, 1
    %v374 = vadd.f32 %v372, %v373
    %v375 = vsel %vm259, %v335, 0.0
    %v376 = vrot.slane %v375, 4
    %v377 = vadd.f32 %v375, %v376
    %v378 = vrot.slane %v377, 2
    %v379 = vadd.f32 %v377, %v378
    %v380 = vrot.slane %v379, 1
    %v381 = vadd.f32 %v379, %v380
    %v382 = vsel %vm259, %v337, 0.0
    %v383 = vrot.slane %v382, 4
    %v384 = vadd.f32 %v382, %v383
    %v385 = vrot.slane %v384, 2
    %v386 = vadd.f32 %v384, %v385
    %v387 = vrot.slane %v386, 1
    %v388 = vadd.f32 %v386, %v387
    %v389 = vsel %vm259, %v339, 0.0
    %v390 = vrot.slane %v389, 4
    %v391 = vadd.f32 %v389, %v390
    %v392 = vrot.slane %v391, 2
    %v393 = vadd.f32 %v391, %v392
    %v394 = vrot.slane %v393, 1
    %v395 = vadd.f32 %v393, %v394
    %v396 = vrcp.pop %v346
    %v397 = vrcp.pop %v353
    %v398 = vrcp.pop %v360
    %v399 = vrcp.pop %v367
    %v400 = vrcp.pop %v374
    %v401 = vrcp.pop %v381
    %v402 = vrcp.pop %v388
    %v403 = vrcp.pop %v395
    %v404 = vld [vmem:[#allocation8] sm:$0x1]
    %v405 = vmul.f32 %v404, %v396
    %v406 = vmul.f32 %v404, %v397
    %v407 = vmul.f32 %v404, %v398
    %v408 = vmul.f32 %v404, %v399
    %v409 = vmul.f32 %v404, %v400
    %v410 = vmul.f32 %v404, %v401
    %v411 = vmul.f32 %v404, %v402
    %v412 = vmul.f32 %v404, %v403
    %v421 = vlaneseq
    %v422 = vshrl.u32 %v421, 7
    %v423 = vsub.s32 0, %v422
    %v424 = vrot.slane %v405, %v423
    %v425 = vlaneseq
    %v426 = vshrl.u32 %v425, 7
    %v427 = vsub.s32 0, %v426
    %v428 = vrot.slane %v406, %v427
    %v429 = vlaneseq
    %v430 = vshrl.u32 %v429, 7
    %v431 = vsub.s32 0, %v430
    %v432 = vrot.slane %v407, %v431
    %v433 = vlaneseq
    %v434 = vshrl.u32 %v433, 7
    %v435 = vsub.s32 0, %v434
    %v436 = vrot.slane %v408, %v435
    %v437 = vlaneseq
    %v438 = vshrl.u32 %v437, 7
    %v439 = vsub.s32 0, %v438
    %v440 = vrot.slane %v409, %v439
    %v441 = vlaneseq
    %v442 = vshrl.u32 %v441, 7
    %v443 = vsub.s32 0, %v442
    %v444 = vrot.slane %v410, %v443
    %v445 = vlaneseq
    %v446 = vshrl.u32 %v445, 7
    %v447 = vsub.s32 0, %v446
    %v448 = vrot.slane %v411, %v447
    %v449 = vlaneseq
    %v450 = vshrl.u32 %v449, 7
    %v451 = vsub.s32 0, %v450
    %v452 = vrot.slane %v412, %v451
    %v461 = vmul.f32 %v325, %v424
    %v462 = vmul.f32 %v327, %v428
    %v463 = vmul.f32 %v329, %v432
    %v464 = vmul.f32 %v331, %v436
    %v465 = vmul.f32 %v333, %v440
    %v466 = vmul.f32 %v335, %v444
    %v467 = vmul.f32 %v337, %v448
    %v468 = vmul.f32 %v339, %v452
    %v469 = vsel %vm259, %v461, 0.0
    %470 = vadd.xlane.f32.xlu0 %v469
    %v471 = vpop.xlane.xlu0 %470
    %v472 = vsel %vm259, %v462, 0.0
    %473 = vadd.xlane.f32.xlu0 %v472
    %v474 = vpop.xlane.xlu0 %473
    %v475 = vsel %vm259, %v463, 0.0
    %476 = vadd.xlane.f32.xlu0 %v475
    %v477 = vpop.xlane.xlu0 %476
    %v478 = vsel %vm259, %v464, 0.0
    %479 = vadd.xlane.f32.xlu0 %v478
    %v480 = vpop.xlane.xlu0 %479
    %v481 = vsel %vm259, %v465, 0.0
    %482 = vadd.xlane.f32.xlu0 %v481
    %v483 = vpop.xlane.xlu0 %482
    %v484 = vsel %vm259, %v466, 0.0
    %485 = vadd.xlane.f32.xlu0 %v484
    %v486 = vpop.xlane.xlu0 %485
    %v487 = vsel %vm259, %v467, 0.0
    %488 = vadd.xlane.f32.xlu0 %v487
    %v489 = vpop.xlane.xlu0 %488
    %v490 = vsel %vm259, %v468, 0.0
    %491 = vadd.xlane.f32.xlu0 %v490
    %v492 = vpop.xlane.xlu0 %491
    %v493 = vmax.f32 %v471, 0.0
    %v494 = vmax.f32 %v474, 0.0
    %v495 = vmax.f32 %v477, 0.0
    %v496 = vmax.f32 %v480, 0.0
    %v497 = vmax.f32 %v483, 0.0
    %v498 = vmax.f32 %v486, 0.0
    %v499 = vmax.f32 %v489, 0.0
    %v500 = vmax.f32 %v492, 0.0
    %v509 = vlaneseq
    %v510 = vand.u32 %v509, 127
    %v511 = vlaneseq
    %v512 = vshrl.u32 %v511, 7
    %v513 = vsub.s32 %v510, %v512
    %v514 = vrot.slane %v493, %v513
    %v515 = vlaneseq
    %v516 = vshrl.u32 %v515, 7
    %v517 = vsub.s32 %v510, %v516
    %v518 = vrot.slane %v494, %v517
    %v519 = vlaneseq
    %v520 = vshrl.u32 %v519, 7
    %v521 = vsub.s32 %v510, %v520
    %v522 = vrot.slane %v495, %v521
    %v523 = vlaneseq
    %v524 = vshrl.u32 %v523, 7
    %v525 = vsub.s32 %v510, %v524
    %v526 = vrot.slane %v496, %v525
    %v527 = vlaneseq
    %v528 = vshrl.u32 %v527, 7
    %v529 = vsub.s32 %v510, %v528
    %v530 = vrot.slane %v497, %v529
    %v531 = vlaneseq
    %v532 = vshrl.u32 %v531, 7
    %v533 = vsub.s32 %v510, %v532
    %v534 = vrot.slane %v498, %v533
    %v535 = vlaneseq
    %v536 = vshrl.u32 %v535, 7
    %v537 = vsub.s32 %v510, %v536
    %v538 = vrot.slane %v499, %v537
    %v539 = vlaneseq
    %v540 = vshrl.u32 %v539, 7
    %v541 = vsub.s32 %v510, %v540
    %v542 = vrot.slane %v500, %v541
    %vm543 = vcmask 1041409
    %v544 = vsel %vm543, %v518, %v514
    %vm545 = vcmask 1042434
    %v546 = vsel %vm545, %v522, %v544
    %vm547 = vcmask 1043459
    %v548 = vsel %vm547, %v526, %v546
    %vm549 = vcmask 1044484
    %v550 = vsel %vm549, %v530, %v548
    %vm551 = vcmask 1045509
    %v552 = vsel %vm551, %v534, %v550
    %vm553 = vcmask 1046534
    %v554 = vsel %vm553, %v538, %v552
    %vm555 = vcmask 1047559
    %v556 = vsel %vm555, %v542, %v554
    %vm558 = vcmask 15360
    %559 = vst.msk [vmem:[#allocation10] sm:$0xff] %vm558, %v556
    // Predicated region
    $region34: #{_attention_forward_impl.1} parent=1 // pred_check
      _
    $region35: #{_attention_forward_impl.1} parent=1 // pred_check_branch
      %561 = sbr.rel (0) target = $region37
    $region36: #{_attention_forward_impl.1} parent=1 // pred_region
      %s563 = ssub.s32 128, 128
      %564 = vsyncadd [#allocation4], %s563
      %s566 = sshll.u32 [#allocation10], 4
      %s567 = int_to_ptr.vmem [resolvable:$true] %s566
      %569 = dma.vmem_to_hbm [thread:$0]  %s567, 128, %s4, [#allocation4]
    $region37: #{_attention_forward_impl.1} parent=1 // pred_fallthru
      _
    // Predicated region
    $region38: #{_attention_forward_impl.1} parent=1 // pred_check
      _
    $region39: #{_attention_forward_impl.1} parent=1 // pred_check_branch
      %571 = sbr.rel (0) target = $region41
    $region40: #{_attention_forward_impl.1} parent=1 // pred_region
      %572 = dma.done [#allocation4], 128
    $region41: #{_attention_forward_impl.1} parent=1 // pred_fallthru
      _
    %573 = vsyncpa [#allocation3], 1
    %574 = vsyncpa [#allocation6], 1
    %575 = vsyncpa [#allocation9], 1
    %576 = vsyncpa [#allocation4], 1

</llo_original>
